<compile_context>
chip_gen: v7x
topology: tpu7x:2x2x1
jax: 0.10.0
libtpu: 0.0.40
codegen_flags: <defaults>
</compile_context>

<pallas_src>
import math
import numpy as np

import jax
import jax.numpy as jnp
from jax import lax
from jax.experimental import pallas as pl
from jax.experimental.pallas import tpu as pltpu

# ----------------------------- config (small) -----------------------------
B = 2           # batch
S = 8           # sequence length
H = 32          # hidden_size
NH = 4          # num_attention_heads
HD = H // NH    # attention_head_size
I = 64          # intermediate_size
EPS = 1e-12     # layer_norm_eps

BS = B * S      # total tokens
RNH = BS * NH   # (token, head) rows in the expanded attention problem


def _layernorm(x, gamma, beta):
    mean = jnp.mean(x, axis=-1, keepdims=True)
    var = jnp.mean((x - mean) ** 2, axis=-1, keepdims=True)
    return (x - mean) * lax.rsqrt(var + EPS) * gamma + beta


def _gelu_exact(x):
    # HF ACT2FN['gelu'] == exact (erf) gelu
    return 0.5 * x * (1.0 + lax.erf(x * (1.0 / math.sqrt(2.0))))


# ----------------------------- Pallas kernel ------------------------------
def bert_layer_kernel(x_ref, bias_ref, expand_ref, hmask_ref, gather_ref,
                      wqkv_ref, wo_ref, wi_ref, wo2_ref, vp_ref, out_ref):
    x = x_ref[...]                      # (BS, H)   all tokens of the whole batch
    vp = vp_ref[...]                    # (8, 3H)   packed vector params

    b_qkv = vp[0:1, :]                  # (1, 3H)   (Q bias already pre-scaled)
    b_o   = vp[1:2, 0:H]
    g1    = vp[2:3, 0:H]
    be1   = vp[3:4, 0:H]
    b_i   = vp[4:5, 0:I]
    b_o2  = vp[5:6, 0:H]
    g2    = vp[6:7, 0:H]
    be2   = vp[7:8, 0:H]

    # --- fused Q/K/V projection: one MXU matmul instead of three.
    # The 1/sqrt(HD) attention scale is folded into the Q columns of wqkv/b_qkv.
    qkv = jnp.dot(x, wqkv_ref[...], preferred_element_type=jnp.float32) + b_qkv
    q = qkv[:, 0:H]
    k = qkv[:, H:2 * H]
    v = qkv[:, 2 * H:3 * H]

    # --- multi-head attention for all (batch, head) pairs at once.
    # Precomputed selectors: expand (RNH, BS) row->token, hmask (RNH, H) head-lane
    # indicator, gather (BS, RNH) token<-row re-concat. No per-call iota work.
    hmask = hmask_ref[...]
    qh = jnp.dot(expand_ref[...], q, preferred_element_type=jnp.float32) * hmask   # (RNH, H)

    # scores = qh @ k^T without materializing k.T (contract last dims of both).
    scores = lax.dot_general(qh, k, (((1,), (1,)), ((), ())),
                             preferred_element_type=jnp.float32)                   # (RNH, BS)

    # Single fused additive bias: block-diagonal batch mask (-1e9 across batch
    # entries) already combined with the HF additive attention mask in the wrapper.
    scores = scores + bias_ref[...]

    m = jnp.max(scores, axis=-1, keepdims=True)
    p = jnp.exp(scores - m)
    # Approximate reciprocal rides on the EUP slot (free vs. VALU divide).
    probs = p * pl.reciprocal(jnp.sum(p, axis=-1, keepdims=True), approx=True)

    c = jnp.dot(probs, v, preferred_element_type=jnp.float32) * hmask              # (RNH, H)
    ctx = jnp.dot(gather_ref[...], c, preferred_element_type=jnp.float32)          # (BS, H)

    # --- BertSelfOutput: dense + residual + LayerNorm (dropout = identity in eval).
    attn = jnp.dot(ctx, wo_ref[...], preferred_element_type=jnp.float32) + b_o
    y = _layernorm(attn + x, g1, be1)

    # --- BertIntermediate (dense + exact gelu) + BertOutput (dense + residual + LN).
    inter = _gelu_exact(jnp.dot(y, wi_ref[...], preferred_element_type=jnp.float32) + b_i)
    ffn = jnp.dot(inter, wo2_ref[...], preferred_element_type=jnp.float32) + b_o2
    out_ref[...] = _layernorm(ffn + y, g2, be2)


# ------------------- one-time parameter / constant packing ------------------
def pack_bert_layer_params(params):
    """Run ONCE at init: packs the 16 HF tensors + constant selectors into 9 arrays."""
    (wq, bq, wk, bk, wv, bv, wo, bo, g1, b1, wi, bi, wo2, bo2, g2, b2) = params
    P = 3 * H
    scale = 1.0 / math.sqrt(HD)

    # Fold the attention scale into the Q projection.
    w_qkv = jnp.concatenate([wq * scale, wk, wv], axis=1)          # (H, 3H)

    vec = np.zeros((8, P), np.float32)
    vec[0, :] = np.concatenate([np.asarray(bq[0]) * scale, np.asarray(bk[0]), np.asarray(bv[0])])
    vec[1, :H] = np.asarray(bo[0])
    vec[2, :H] = np.asarray(g1[0])
    vec[3, :H] = np.asarray(b1[0])
    vec[4, :I] = np.asarray(bi[0])
    vec[5, :H] = np.asarray(bo2[0])
    vec[6, :H] = np.asarray(g2[0])
    vec[7, :H] = np.asarray(b2[0])
    vec = jnp.asarray(vec)

    # Constant selector matrices / masks (replace per-call iota work in the kernel).
    r = np.arange(RNH)
    c = np.arange(BS)
    d = np.arange(H)
    expand = (r[:, None] // NH == c[None, :]).astype(np.float32)           # (RNH, BS)
    hmask = (d[None, :] // HD == (r[:, None] % NH)).astype(np.float32)     # (RNH, H)
    gather = expand.T.copy()                                               # (BS, RNH)
    # Block-diagonal batch bias: tokens never attend across batch entries.
    rb = (r // (NH * S))[:, None]
    cb = (c // S)[None, :]
    block_bias = np.where(rb == cb, 0.0, -1e9).astype(np.float32)          # (RNH, BS)

    return (w_qkv, wo, wi, wo2, vec,
            jnp.asarray(expand), jnp.asarray(hmask), jnp.asarray(gather),
            jnp.asarray(block_bias))


# ------------------------------- wrapper ------------------------------------
_vmem_spec = pl.BlockSpec(memory_space=pltpu.MemorySpace.VMEM)


@jax.jit
def bert_layer(hidden_states, attention_mask, packed):
    """hidden_states: (B, S, H) f32; attention_mask: (B, 1, S) additive f32."""
    (w_qkv, wo, wi, wo2, vec, expand, hmask, gather, block_bias) = packed

    x2d = hidden_states.reshape(BS, H)
    # Merge the constant block-diagonal bias with the per-call additive mask once
    # (tiny (RNH, BS) add) so the kernel does a single bias add before softmax.
    bias = block_bias + attention_mask.reshape(1, BS)

    # Single kernel invocation: the whole (tiny) problem lives in VMEM, no grid loop.
    out2d = pl.pallas_call(
        bert_layer_kernel,
        out_shape=jax.ShapeDtypeStruct((BS, H), jnp.float32),
        in_specs=[_vmem_spec] * 10,
        out_specs=_vmem_spec,
    )(x2d, bias, expand, hmask, gather, w_qkv, wo, wi, wo2, vec)
    return out2d.reshape(B, S, H)


# -------------------------- pure-JAX reference ----------------------------
def bert_layer_ref(x, mask, params):
    (wq, bq, wk, bk, wv, bv, wo, bo, g1, b1, wi, bi, wo2, bo2, g2, b2) = params
    q = x @ wq + bq
    k = x @ wk + bk
    v = x @ wv + bv

    def split(t):  # (B,S,H) -> (B,NH,S,HD)
        return t.reshape(B, S, NH, HD).transpose(0, 2, 1, 3)

    qh, kh, vh = split(q), split(k), split(v)
    scores = jnp.einsum('bhqd,bhkd->bhqk', qh, kh) / math.sqrt(HD)
    scores = scores + mask[:, :, None, :]          # (B,1,1,S) broadcast
    probs = jax.nn.softmax(scores, axis=-1)
    ctx = jnp.einsum('bhqk,bhkd->bhqd', probs, vh)
    ctx = ctx.transpose(0, 2, 1, 3).reshape(B, S, H)
    attn = ctx @ wo + bo
    y = _layernorm(attn + x, g1, b1)
    inter = _gelu_exact(y @ wi + bi)
    ffn = inter @ wo2 + bo2
    return _layernorm(ffn + y, g2, b2)


# ------------------------------- main --------------------------------------
if __name__ == "__main__":
    key = jax.random.PRNGKey(0)
    ks = jax.random.split(key, 16)
    s = 0.05
    params = (
        jax.random.normal(ks[0], (H, H), jnp.float32) * s,   # wq  ([in,out])
        jax.random.normal(ks[1], (1, H), jnp.float32) * s,   # bq
        jax.random.normal(ks[2], (H, H), jnp.float32) * s,   # wk
        jax.random.normal(ks[3], (1, H), jnp.float32) * s,   # bk
        jax.random.normal(ks[4], (H, H), jnp.float32) * s,   # wv
        jax.random.normal(ks[5], (1, H), jnp.float32) * s,   # bv
        jax.random.normal(ks[6], (H, H), jnp.float32) * s,   # wo (self-output)
        jax.random.normal(ks[7], (1, H), jnp.float32) * s,   # bo
        jnp.ones((1, H), jnp.float32),                       # LN1 gamma
        jnp.zeros((1, H), jnp.float32),                      # LN1 beta
        jax.random.normal(ks[8], (H, I), jnp.float32) * s,   # wi (intermediate)
        jax.random.normal(ks[9], (1, I), jnp.float32) * s,   # bi
        jax.random.normal(ks[10], (I, H), jnp.float32) * s,  # wo2 (output)
        jax.random.normal(ks[11], (1, H), jnp.float32) * s,  # bo2
        jnp.ones((1, H), jnp.float32),                       # LN2 gamma
        jnp.zeros((1, H), jnp.float32),                      # LN2 beta
    )

    # One-time packing (hoisted out of the per-forward path).
    packed = jax.tree_util.tree_map(jax.block_until_ready, pack_bert_layer_params(params))

    hidden_states = jax.random.normal(ks[12], (B, S, H), jnp.float32)
    # Additive attention mask (HF-style): 0 for keep, -10000 for masked.
    attention_mask = jnp.zeros((B, 1, S), jnp.float32)
    attention_mask = attention_mask.at[1, 0, -2:].set(-10000.0)

    out = bert_layer(hidden_states, attention_mask, packed)
    out = jax.block_until_ready(out)

    ref = bert_layer_ref(hidden_states, attention_mask, params)
    assert out.shape == (B, S, H)
    # Tolerance relaxed vs. 1e-4 because of the approximate (EUP) softmax reciprocal;
    # mask add, softmax, LayerNorm and GELU remain exact f32.
    assert jnp.allclose(out, ref, atol=2e-3, rtol=2e-3), float(jnp.max(jnp.abs(out - ref)))

    print("KERNEL_OK")
</pallas_src>

<mosaic_0001>
module attributes {stable_mosaic.version = 11 : i64} {
  func.func @bert_layer_kernel(%arg0: memref<16x32xf32, #tpu.memory_space<vmem>>, %arg1: memref<64x16xf32, #tpu.memory_space<vmem>>, %arg2: memref<64x16xf32, #tpu.memory_space<vmem>>, %arg3: memref<64x32xf32, #tpu.memory_space<vmem>>, %arg4: memref<16x64xf32, #tpu.memory_space<vmem>>, %arg5: memref<32x96xf32, #tpu.memory_space<vmem>>, %arg6: memref<32x32xf32, #tpu.memory_space<vmem>>, %arg7: memref<32x64xf32, #tpu.memory_space<vmem>>, %arg8: memref<64x32xf32, #tpu.memory_space<vmem>>, %arg9: memref<8x96xf32, #tpu.memory_space<vmem>>, %arg10: memref<16x32xf32, #tpu.memory_space<vmem>>) attributes {dimension_semantics = [], scalar_prefetch = 0 : i64, scratch_operands = 0 : i64, tpu.core_type = #tpu.core_type<tc>} {
    %c0 = arith.constant 0 : index
    %c0_0 = arith.constant 0 : index
    %0 = vector.load %arg0[%c0, %c0_0] : memref<16x32xf32, #tpu.memory_space<vmem>>, vector<16x32xf32>
    %c0_1 = arith.constant 0 : index
    %c0_2 = arith.constant 0 : index
    %1 = vector.load %arg9[%c0_1, %c0_2] : memref<8x96xf32, #tpu.memory_space<vmem>>, vector<8x96xf32>
    %2 = vector.extract_strided_slice %1 {offsets = [0, 0], sizes = [1, 96], strides = [1, 1]} : vector<8x96xf32> to vector<1x96xf32>
    %3 = vector.extract_strided_slice %1 {offsets = [1, 0], sizes = [1, 32], strides = [1, 1]} : vector<8x96xf32> to vector<1x32xf32>
    %4 = vector.extract_strided_slice %1 {offsets = [2, 0], sizes = [1, 32], strides = [1, 1]} : vector<8x96xf32> to vector<1x32xf32>
    %5 = vector.extract_strided_slice %1 {offsets = [3, 0], sizes = [1, 32], strides = [1, 1]} : vector<8x96xf32> to vector<1x32xf32>
    %6 = vector.extract_strided_slice %1 {offsets = [4, 0], sizes = [1, 64], strides = [1, 1]} : vector<8x96xf32> to vector<1x64xf32>
    %7 = vector.extract_strided_slice %1 {offsets = [5, 0], sizes = [1, 32], strides = [1, 1]} : vector<8x96xf32> to vector<1x32xf32>
    %8 = vector.extract_strided_slice %1 {offsets = [6, 0], sizes = [1, 32], strides = [1, 1]} : vector<8x96xf32> to vector<1x32xf32>
    %9 = vector.extract_strided_slice %1 {offsets = [7, 0], sizes = [1, 32], strides = [1, 1]} : vector<8x96xf32> to vector<1x32xf32>
    %c0_3 = arith.constant 0 : index
    %c0_4 = arith.constant 0 : index
    %10 = vector.load %arg5[%c0_3, %c0_4] : memref<32x96xf32, #tpu.memory_space<vmem>>, vector<32x96xf32>
    %cst = arith.constant dense<0.000000e+00> : vector<16x96xf32>
    %11 = tpu.matmul %0, %10, %cst {dimension_numbers = #tpu.dot_dimension_numbers<[1], [0], [0], [1], [0, 0, 1, 1], [], []>} : vector<16x32xf32>, vector<32x96xf32>, vector<16x96xf32> -> vector<16x96xf32>
    %12 = vector.broadcast %2 : vector<1x96xf32> to vector<16x96xf32>
    %13 = arith.addf %11, %12 : vector<16x96xf32>
    %14 = vector.extract_strided_slice %13 {offsets = [0, 0], sizes = [16, 32], strides = [1, 1]} : vector<16x96xf32> to vector<16x32xf32>
    %15 = vector.extract_strided_slice %13 {offsets = [0, 32], sizes = [16, 32], strides = [1, 1]} : vector<16x96xf32> to vector<16x32xf32>
    %16 = vector.extract_strided_slice %13 {offsets = [0, 64], sizes = [16, 32], strides = [1, 1]} : vector<16x96xf32> to vector<16x32xf32>
    %c0_5 = arith.constant 0 : index
    %c0_6 = arith.constant 0 : index
    %17 = vector.load %arg3[%c0_5, %c0_6] : memref<64x32xf32, #tpu.memory_space<vmem>>, vector<64x32xf32>
    %c0_7 = arith.constant 0 : index
    %c0_8 = arith.constant 0 : index
    %18 = vector.load %arg2[%c0_7, %c0_8] : memref<64x16xf32, #tpu.memory_space<vmem>>, vector<64x16xf32>
    %cst_9 = arith.constant dense<0.000000e+00> : vector<64x32xf32>
    %19 = tpu.matmul %18, %14, %cst_9 {dimension_numbers = #tpu.dot_dimension_numbers<[1], [0], [0], [1], [0, 0, 1, 1], [], []>} : vector<64x16xf32>, vector<16x32xf32>, vector<64x32xf32> -> vector<64x32xf32>
    %20 = arith.mulf %19, %17 : vector<64x32xf32>
    %cst_10 = arith.constant dense<0.000000e+00> : vector<64x16xf32>
    %21 = tpu.matmul %20, %15, %cst_10 {dimension_numbers = #tpu.dot_dimension_numbers<[1], [1], [0], [0], [0, 0, 1, 0], [], []>} : vector<64x32xf32>, vector<16x32xf32>, vector<64x16xf32> -> vector<64x16xf32>
    %c0_11 = arith.constant 0 : index
    %c0_12 = arith.constant 0 : index
    %22 = vector.load %arg1[%c0_11, %c0_12] : memref<64x16xf32, #tpu.memory_space<vmem>>, vector<64x16xf32>
    %23 = arith.addf %21, %22 : vector<64x16xf32>
    %cst_13 = arith.constant dense<0xFF800000> : vector<64xf32>
    %24 = vector.multi_reduction <maximumf>, %23, %cst_13 [1] : vector<64x16xf32> to vector<64xf32>
    %25 = vector.shape_cast %24 : vector<64xf32> to vector<64x1xf32>
    %26 = vector.broadcast %25 : vector<64x1xf32> to vector<64x16xf32>
    %27 = arith.subf %23, %26 : vector<64x16xf32>
    %28 = math.exp %27 : vector<64x16xf32>
    %cst_14 = arith.constant dense<0.000000e+00> : vector<64xf32>
    %29 = vector.multi_reduction <add>, %28, %cst_14 [1] : vector<64x16xf32> to vector<64xf32>
    %30 = vector.shape_cast %29 : vector<64xf32> to vector<64x1xf32>
    %31 = tpu.reciprocal %30 {approx = true} : vector<64x1xf32> -> vector<64x1xf32>
    %32 = vector.broadcast %31 : vector<64x1xf32> to vector<64x16xf32>
    %33 = arith.mulf %28, %32 : vector<64x16xf32>
    %cst_15 = arith.constant dense<0.000000e+00> : vector<64x32xf32>
    %34 = tpu.matmul %33, %16, %cst_15 {dimension_numbers = #tpu.dot_dimension_numbers<[1], [0], [0], [1], [0, 0, 1, 1], [], []>} : vector<64x16xf32>, vector<16x32xf32>, vector<64x32xf32> -> vector<64x32xf32>
    %35 = arith.mulf %34, %17 : vector<64x32xf32>
    %c0_16 = arith.constant 0 : index
    %c0_17 = arith.constant 0 : index
    %36 = vector.load %arg4[%c0_16, %c0_17] : memref<16x64xf32, #tpu.memory_space<vmem>>, vector<16x64xf32>
    %cst_18 = arith.constant dense<0.000000e+00> : vector<16x32xf32>
    %37 = tpu.matmul %36, %35, %cst_18 {dimension_numbers = #tpu.dot_dimension_numbers<[1], [0], [0], [1], [0, 0, 1, 1], [], []>} : vector<16x64xf32>, vector<64x32xf32>, vector<16x32xf32> -> vector<16x32xf32>
    %c0_19 = arith.constant 0 : index
    %c0_20 = arith.constant 0 : index
    %38 = vector.load %arg6[%c0_19, %c0_20] : memref<32x32xf32, #tpu.memory_space<vmem>>, vector<32x32xf32>
    %cst_21 = arith.constant dense<0.000000e+00> : vector<16x32xf32>
    %39 = tpu.matmul %37, %38, %cst_21 {dimension_numbers = #tpu.dot_dimension_numbers<[1], [0], [0], [1], [0, 0, 1, 1], [], []>} : vector<16x32xf32>, vector<32x32xf32>, vector<16x32xf32> -> vector<16x32xf32>
    %40 = vector.broadcast %3 : vector<1x32xf32> to vector<16x32xf32>
    %41 = arith.addf %39, %40 : vector<16x32xf32>
    %42 = arith.addf %41, %0 : vector<16x32xf32>
    %cst_22 = arith.constant dense<0.000000e+00> : vector<16xf32>
    %43 = vector.multi_reduction <add>, %42, %cst_22 [1] : vector<16x32xf32> to vector<16xf32>
    %44 = vector.shape_cast %43 : vector<16xf32> to vector<16x1xf32>
    %cst_23 = arith.constant 3.200000e+01 : f32
    %45 = vector.broadcast %cst_23 : f32 to vector<16x1xf32>
    %46 = arith.divf %44, %45 : vector<16x1xf32>
    %47 = vector.broadcast %46 : vector<16x1xf32> to vector<16x32xf32>
    %48 = arith.subf %42, %47 : vector<16x32xf32>
    %49 = arith.mulf %48, %48 : vector<16x32xf32>
    %cst_24 = arith.constant dense<0.000000e+00> : vector<16xf32>
    %50 = vector.multi_reduction <add>, %49, %cst_24 [1] : vector<16x32xf32> to vector<16xf32>
    %51 = vector.shape_cast %50 : vector<16xf32> to vector<16x1xf32>
    %cst_25 = arith.constant 3.200000e+01 : f32
    %52 = vector.broadcast %cst_25 : f32 to vector<16x1xf32>
    %53 = arith.divf %51, %52 : vector<16x1xf32>
    %54 = vector.broadcast %46 : vector<16x1xf32> to vector<16x32xf32>
    %55 = arith.subf %42, %54 : vector<16x32xf32>
    %cst_26 = arith.constant 9.99999996E-13 : f32
    %56 = vector.broadcast %cst_26 : f32 to vector<16x1xf32>
    %57 = arith.addf %53, %56 : vector<16x1xf32>
    %58 = math.rsqrt %57 : vector<16x1xf32>
    %59 = vector.broadcast %58 : vector<16x1xf32> to vector<16x32xf32>
    %60 = arith.mulf %55, %59 : vector<16x32xf32>
    %61 = vector.broadcast %4 : vector<1x32xf32> to vector<16x32xf32>
    %62 = arith.mulf %60, %61 : vector<16x32xf32>
    %63 = vector.broadcast %5 : vector<1x32xf32> to vector<16x32xf32>
    %64 = arith.addf %62, %63 : vector<16x32xf32>
    %c0_27 = arith.constant 0 : index
    %c0_28 = arith.constant 0 : index
    %65 = vector.load %arg7[%c0_27, %c0_28] : memref<32x64xf32, #tpu.memory_space<vmem>>, vector<32x64xf32>
    %cst_29 = arith.constant dense<0.000000e+00> : vector<16x64xf32>
    %66 = tpu.matmul %64, %65, %cst_29 {dimension_numbers = #tpu.dot_dimension_numbers<[1], [0], [0], [1], [0, 0, 1, 1], [], []>} : vector<16x32xf32>, vector<32x64xf32>, vector<16x64xf32> -> vector<16x64xf32>
    %67 = vector.broadcast %6 : vector<1x64xf32> to vector<16x64xf32>
    %68 = arith.addf %66, %67 : vector<16x64xf32>
    %cst_30 = arith.constant 5.000000e-01 : f32
    %69 = vector.broadcast %cst_30 : f32 to vector<16x64xf32>
    %70 = arith.mulf %69, %68 : vector<16x64xf32>
    %cst_31 = arith.constant 0.707106769 : f32
    %71 = vector.broadcast %cst_31 : f32 to vector<16x64xf32>
    %72 = arith.mulf %68, %71 : vector<16x64xf32>
    %73 = math.erf %72 : vector<16x64xf32>
    %cst_32 = arith.constant 1.000000e+00 : f32
    %74 = vector.broadcast %cst_32 : f32 to vector<16x64xf32>
    %75 = arith.addf %74, %73 : vector<16x64xf32>
    %76 = arith.mulf %70, %75 : vector<16x64xf32>
    %c0_33 = arith.constant 0 : index
    %c0_34 = arith.constant 0 : index
    %77 = vector.load %arg8[%c0_33, %c0_34] : memref<64x32xf32, #tpu.memory_space<vmem>>, vector<64x32xf32>
    %cst_35 = arith.constant dense<0.000000e+00> : vector<16x32xf32>
    %78 = tpu.matmul %76, %77, %cst_35 {dimension_numbers = #tpu.dot_dimension_numbers<[1], [0], [0], [1], [0, 0, 1, 1], [], []>} : vector<16x64xf32>, vector<64x32xf32>, vector<16x32xf32> -> vector<16x32xf32>
    %79 = vector.broadcast %7 : vector<1x32xf32> to vector<16x32xf32>
    %80 = arith.addf %78, %79 : vector<16x32xf32>
    %81 = arith.addf %80, %64 : vector<16x32xf32>
    %cst_36 = arith.constant dense<0.000000e+00> : vector<16xf32>
    %82 = vector.multi_reduction <add>, %81, %cst_36 [1] : vector<16x32xf32> to vector<16xf32>
    %83 = vector.shape_cast %82 : vector<16xf32> to vector<16x1xf32>
    %cst_37 = arith.constant 3.200000e+01 : f32
    %84 = vector.broadcast %cst_37 : f32 to vector<16x1xf32>
    %85 = arith.divf %83, %84 : vector<16x1xf32>
    %86 = vector.broadcast %85 : vector<16x1xf32> to vector<16x32xf32>
    %87 = arith.subf %81, %86 : vector<16x32xf32>
    %88 = arith.mulf %87, %87 : vector<16x32xf32>
    %cst_38 = arith.constant dense<0.000000e+00> : vector<16xf32>
    %89 = vector.multi_reduction <add>, %88, %cst_38 [1] : vector<16x32xf32> to vector<16xf32>
    %90 = vector.shape_cast %89 : vector<16xf32> to vector<16x1xf32>
    %cst_39 = arith.constant 3.200000e+01 : f32
    %91 = vector.broadcast %cst_39 : f32 to vector<16x1xf32>
    %92 = arith.divf %90, %91 : vector<16x1xf32>
    %93 = vector.broadcast %85 : vector<16x1xf32> to vector<16x32xf32>
    %94 = arith.subf %81, %93 : vector<16x32xf32>
    %cst_40 = arith.constant 9.99999996E-13 : f32
    %95 = vector.broadcast %cst_40 : f32 to vector<16x1xf32>
    %96 = arith.addf %92, %95 : vector<16x1xf32>
    %97 = math.rsqrt %96 : vector<16x1xf32>
    %98 = vector.broadcast %97 : vector<16x1xf32> to vector<16x32xf32>
    %99 = arith.mulf %94, %98 : vector<16x32xf32>
    %100 = vector.broadcast %8 : vector<1x32xf32> to vector<16x32xf32>
    %101 = arith.mulf %99, %100 : vector<16x32xf32>
    %102 = vector.broadcast %9 : vector<1x32xf32> to vector<16x32xf32>
    %103 = arith.addf %101, %102 : vector<16x32xf32>
    %c0_41 = arith.constant 0 : index
    %c0_42 = arith.constant 0 : index
    %104 = vector.load %arg10[%c0_41, %c0_42] : memref<16x32xf32, #tpu.memory_space<vmem>>, vector<16x32xf32>
    tpu.vector_store %arg10[%c0_41, %c0_42], %103 {strides = array<i32>} : memref<16x32xf32, #tpu.memory_space<vmem>>, vector<16x32xf32>,
    return
  }
}

</mosaic_0001>

<llo_original>
// kernel: bert_layer.1
$region0: #{bert_layer.1}
  #allocation0 [shape = 'u32[]', space=smem, size = 0x4, offset = 0x4, fixed_abs, tag = 'smem constant byte address 0x4 - core index']
  #allocation1 [shape = 'u32[144,128]{1,0:T(1,128)}', space=vmem, size = 0x12000, scoped, tag = 'internal scratch']
  %s0 = inlined_call_operand.vmem [shape: f32[16,32], index: 0, kind: input, shape index: {}]
  %s1 = inlined_call_operand.vmem [shape: f32[64,16], index: 1, kind: input, shape index: {}]
  %s2 = inlined_call_operand.vmem [shape: f32[64,16], index: 2, kind: input, shape index: {}]
  %s3 = inlined_call_operand.vmem [shape: f32[64,32], index: 3, kind: input, shape index: {}]
  %s4 = inlined_call_operand.vmem [shape: f32[16,64], index: 4, kind: input, shape index: {}]
  %s5 = inlined_call_operand.vmem [shape: f32[32,96], index: 5, kind: input, shape index: {}]
  %s6 = inlined_call_operand.vmem [shape: f32[32,32], index: 6, kind: input, shape index: {}]
  %s7 = inlined_call_operand.vmem [shape: f32[32,64], index: 7, kind: input, shape index: {}]
  %s8 = inlined_call_operand.vmem [shape: f32[64,32], index: 8, kind: input, shape index: {}]
  %s9 = inlined_call_operand.vmem [shape: f32[8,96], index: 9, kind: input, shape index: {}]
  %s10 = inlined_call_operand.hbm [shape: f32[16,32], index: 10, kind: output, shape index: {}]
  %s11 = sld [smem:[#allocation0]]
  $region50: #{bert_layer.1} parent=0
    _
  %s13 = ssub.s32 1, %s11
  %s14 = scalar_select 0, %s13, %s11
  $region1: #{bert_layer.1} parent=0
    #allocation2 [shape = 'u8[8192]{0}', space=vmem, size = 0x2000, scoped, tag = 'output window, operand 0, single buffered']
    #allocation3 [shape = 's32[1]{0}', space=sflag, size = 0x4, scoped, tag = 'scoped memory for bert_layer.1']
    %15 = vsyncpa [#allocation3], 0
    // Predicated region
    $region2: #{bert_layer.1} parent=1 // pred_check
      _
    $region3: #{bert_layer.1} parent=1 // pred_check_branch
      %17 = sbr.rel (0) target = $region5
    $region4: #{bert_layer.1} parent=1 // pred_region
      _
    $region5: #{bert_layer.1} parent=1 // pred_fallthru
      _
    // Predicated region
    $region6: #{bert_layer.1} parent=1 // pred_check
      _
    $region7: #{bert_layer.1} parent=1 // pred_check_branch
      %19 = sbr.rel (0) target = $region9
    $region8: #{bert_layer.1} parent=1 // pred_region
      _
    $region9: #{bert_layer.1} parent=1 // pred_fallthru
      _
    // Predicated region
    $region10: #{bert_layer.1} parent=1 // pred_check
      _
    $region11: #{bert_layer.1} parent=1 // pred_check_branch
      %21 = sbr.rel (0) target = $region13
    $region12: #{bert_layer.1} parent=1 // pred_region
      _
    $region13: #{bert_layer.1} parent=1 // pred_fallthru
      _
    // Predicated region
    $region14: #{bert_layer.1} parent=1 // pred_check
      _
    $region15: #{bert_layer.1} parent=1 // pred_check_branch
      %23 = sbr.rel (0) target = $region17
    $region16: #{bert_layer.1} parent=1 // pred_region
      _
    $region17: #{bert_layer.1} parent=1 // pred_fallthru
      _
    // Predicated region
    $region18: #{bert_layer.1} parent=1 // pred_check
      _
    $region19: #{bert_layer.1} parent=1 // pred_check_branch
      %25 = sbr.rel (0) target = $region21
    $region20: #{bert_layer.1} parent=1 // pred_region
      _
    $region21: #{bert_layer.1} parent=1 // pred_fallthru
      _
    // Predicated region
    $region22: #{bert_layer.1} parent=1 // pred_check
      _
    $region23: #{bert_layer.1} parent=1 // pred_check_branch
      %27 = sbr.rel (0) target = $region25
    $region24: #{bert_layer.1} parent=1 // pred_region
      _
    $region25: #{bert_layer.1} parent=1 // pred_fallthru
      _
    // Predicated region
    $region26: #{bert_layer.1} parent=1 // pred_check
      _
    $region27: #{bert_layer.1} parent=1 // pred_check_branch
      %29 = sbr.rel (0) target = $region29
    $region28: #{bert_layer.1} parent=1 // pred_region
      _
    $region29: #{bert_layer.1} parent=1 // pred_fallthru
      _
    // Predicated region
    $region30: #{bert_layer.1} parent=1 // pred_check
      _
    $region31: #{bert_layer.1} parent=1 // pred_check_branch
      %31 = sbr.rel (0) target = $region33
    $region32: #{bert_layer.1} parent=1 // pred_region
      _
    $region33: #{bert_layer.1} parent=1 // pred_fallthru
      _
    // Predicated region
    $region34: #{bert_layer.1} parent=1 // pred_check
      _
    $region35: #{bert_layer.1} parent=1 // pred_check_branch
      %33 = sbr.rel (0) target = $region37
    $region36: #{bert_layer.1} parent=1 // pred_region
      _
    $region37: #{bert_layer.1} parent=1 // pred_fallthru
      _
    // Predicated region
    $region38: #{bert_layer.1} parent=1 // pred_check
      _
    $region39: #{bert_layer.1} parent=1 // pred_check_branch
      %35 = sbr.rel (0) target = $region41
    $region40: #{bert_layer.1} parent=1 // pred_region
      _
    $region41: #{bert_layer.1} parent=1 // pred_fallthru
      _
    %v36 = vld [vmem:[%s0] sm:$0xff]
    %v37 = vld [vmem:[%s0 + $0x8] sm:$0xff]
    %v38 = vld [vmem:[%s9] sm:$0xff]
    %v39 = vld [vmem:[%s5] sm:$0xff]
    %v40 = vld [vmem:[%s5 + $0x8] sm:$0xff]
    %v41 = vld [vmem:[%s5 + $0x10] sm:$0xff]
    %v42 = vld [vmem:[%s5 + $0x18] sm:$0xff]
    %v43 = vlaneseq
    %v44 = vshrl.u32 %v43, 7
    %v45 = vsub.s32 0, %v44
    %v46 = vrot.slane %v38, %v45
    %vm47 = vcmask 261120
    %v49 = vsel %vm47, %v36, 0
    %v52 = vsel %vm47, %v37, 0
    %54 = vmatprep.subr.mxu0 0.0
    %55 = vmatpush1.msra.mxu0 %v39
    %56 = vmatprep.subr.mxu0 0.0
    %57 = vmatpush1.msra.mxu0 %v40
    %58 = vmatprep.subr.mxu0 0.0
    %59 = vmatpush1.msra.mxu0 %v41
    %60 = vmatprep.subr.mxu0 0.0
    %61 = vmatpush1.msra.mxu0 %v42
    %62 = vmatprep.subr.mxu0 0.0
    %63 = vmatpush1.msra.mxu0 0.0
    %64 = vmatprep.subr.mxu0 0.0
    %65 = vmatpush1.msra.mxu0 0.0
    %66 = vmatprep.subr.mxu0 0.0
    %67 = vmatpush1.msra.mxu0 0.0
    %68 = vmatprep.subr.mxu0 0.0
    %69 = vmatpush1.msra.mxu0 0.0
    %70 = vmatprep.subr.mxu0 0.0
    %71 = vmatpush1.msra.mxu0 0.0
    %72 = vmatprep.subr.mxu0 0.0
    %73 = vmatpush1.msra.mxu0 0.0
    %74 = vmatprep.subr.mxu0 0.0
    %75 = vmatpush1.msra.mxu0 0.0
    %76 = vmatprep.subr.mxu0 0.0
    %77 = vmatpush1.msra.mxu0 0.0
    %78 = vmatprep.subr.mxu0 0.0
    %79 = vmatpush1.msra.mxu0 0.0
    %80 = vmatprep.subr.mxu0 0.0
    %81 = vmatpush1.msra.mxu0 0.0
    %82 = vmatprep.subr.mxu0 0.0
    %83 = vmatpush1.msra.mxu0 0.0
    %84 = vmatprep.subr.mxu0 0.0
    %85 = vmatpush1.msra.mxu0 0.0
    %86 = vmatprep.subr.mxu0 0.0
    %87 = vmatpush1.msra.mxu0 0.0
    %88 = vmatprep.subr.mxu0 0.0
    %89 = vmatpush1.msra.mxu0 0.0
    %90 = vmatprep.subr.mxu0 0.0
    %91 = vmatpush1.msra.mxu0 0.0
    %92 = vmatprep.subr.mxu0 0.0
    %93 = vmatpush1.msra.mxu0 0.0
    %94 = vmatprep.subr.mxu0 0.0
    %95 = vmatpush1.msra.mxu0 0.0
    %96 = vmatprep.subr.mxu0 0.0
    %97 = vmatpush1.msra.mxu0 0.0
    %98 = vmatprep.subr.mxu0 0.0
    %99 = vmatpush1.msra.mxu0 0.0
    %100 = vmatprep.subr.mxu0 0.0
    %101 = vmatpush1.msra.mxu0 0.0
    %102 = vmatprep.subr.mxu0 0.0
    %103 = vmatpush1.msra.mxu0 0.0
    %104 = vmatprep.subr.mxu0 0.0
    %105 = vmatpush1.msra.mxu0 0.0
    %106 = vmatprep.subr.mxu0 0.0
    %107 = vmatpush1.msra.mxu0 0.0
    %108 = vmatprep.subr.mxu0 0.0
    %109 = vmatpush1.msra.mxu0 0.0
    %110 = vmatprep.subr.mxu0 0.0
    %111 = vmatpush1.msra.mxu0 0.0
    %112 = vmatprep.subr.mxu0 0.0
    %113 = vmatpush1.msra.mxu0 0.0
    %114 = vmatprep.subr.mxu0 0.0
    %115 = vmatpush1.msra.mxu0 0.0
    %116 = vmatprep.subr.mxu0 0.0
    %117 = vmatpush1.msra.mxu0 0.0
    %118 = vmatprep.mubr.f32.mxu0 0.0
    %119 = vmatmul.mubr.f32.gmra.mrb[0].mxu0 %v49
    %v120 = vpop.f32.mrb[0].mxu0
    %v121 = vadd.f32 %v46, %v120
    %v122 = vpop.f32.mrb[0].mxu0
    %123 = vmatprep.mubr.f32.mxu0 0.0
    %124 = vmatmul.mubr.f32.gmra.mrb[0].mxu0 %v52
    %v125 = vpop.f32.mrb[0].mxu0
    %v126 = vadd.f32 %v46, %v125
    %v127 = vpop.f32.mrb[0].mxu0
    %128 = vdwg.mxu0
    %v129 = vld [vmem:[%s3] sm:$0xff]
    %v130 = vld [vmem:[%s3 + $0x8] sm:$0xff]
    %v131 = vld [vmem:[%s3 + $0x10] sm:$0xff]
    %v132 = vld [vmem:[%s3 + $0x18] sm:$0xff]
    %v133 = vld [vmem:[%s3 + $0x20] sm:$0xff]
    %v134 = vld [vmem:[%s3 + $0x28] sm:$0xff]
    %v135 = vld [vmem:[%s3 + $0x30] sm:$0xff]
    %v136 = vld [vmem:[%s3 + $0x38] sm:$0xff]
    %v137 = vld [vmem:[%s2] sm:$0xff]
    %v138 = vld [vmem:[%s2 + $0x8] sm:$0xff]
    %v139 = vld [vmem:[%s2 + $0x10] sm:$0xff]
    %v140 = vld [vmem:[%s2 + $0x18] sm:$0xff]
    %v141 = vld [vmem:[%s2 + $0x20] sm:$0xff]
    %v142 = vld [vmem:[%s2 + $0x28] sm:$0xff]
    %v143 = vld [vmem:[%s2 + $0x30] sm:$0xff]
    %v144 = vld [vmem:[%s2 + $0x38] sm:$0xff]
    %vm145 = vcmask 130048
    %v147 = vsel %vm145, %v137, 0
    %v150 = vsel %vm145, %v138, 0
    %v153 = vsel %vm145, %v139, 0
    %v156 = vsel %vm145, %v140, 0
    %v159 = vsel %vm145, %v141, 0
    %v162 = vsel %vm145, %v142, 0
    %v165 = vsel %vm145, %v143, 0
    %v168 = vsel %vm145, %v144, 0
    %170 = vmatprep.subr.mxu0 0.0
    %171 = vmatpush1.msra.mxu0 %v121
    %172 = vmatprep.subr.mxu0 0.0
    %173 = vmatpush1.msra.mxu0 %v126
    %174 = vmatprep.subr.mxu0 0.0
    %175 = vmatpush1.msra.mxu0 0.0
    %176 = vmatprep.subr.mxu0 0.0
    %177 = vmatpush1.msra.mxu0 0.0
    %178 = vmatprep.subr.mxu0 0.0
    %179 = vmatpush1.msra.mxu0 0.0
    %180 = vmatprep.subr.mxu0 0.0
    %181 = vmatpush1.msra.mxu0 0.0
    %182 = vmatprep.subr.mxu0 0.0
    %183 = vmatpush1.msra.mxu0 0.0
    %184 = vmatprep.subr.mxu0 0.0
    %185 = vmatpush1.msra.mxu0 0.0
    %186 = vmatprep.subr.mxu0 0.0
    %187 = vmatpush1.msra.mxu0 0.0
    %188 = vmatprep.subr.mxu0 0.0
    %189 = vmatpush1.msra.mxu0 0.0
    %190 = vmatprep.subr.mxu0 0.0
    %191 = vmatpush1.msra.mxu0 0.0
    %192 = vmatprep.subr.mxu0 0.0
    %193 = vmatpush1.msra.mxu0 0.0
    %194 = vmatprep.subr.mxu0 0.0
    %195 = vmatpush1.msra.mxu0 0.0
    %196 = vmatprep.subr.mxu0 0.0
    %197 = vmatpush1.msra.mxu0 0.0
    %198 = vmatprep.subr.mxu0 0.0
    %199 = vmatpush1.msra.mxu0 0.0
    %200 = vmatprep.subr.mxu0 0.0
    %201 = vmatpush1.msra.mxu0 0.0
    %202 = vmatprep.subr.mxu0 0.0
    %203 = vmatpush1.msra.mxu0 0.0
    %204 = vmatprep.subr.mxu0 0.0
    %205 = vmatpush1.msra.mxu0 0.0
    %206 = vmatprep.subr.mxu0 0.0
    %207 = vmatpush1.msra.mxu0 0.0
    %208 = vmatprep.subr.mxu0 0.0
    %209 = vmatpush1.msra.mxu0 0.0
    %210 = vmatprep.subr.mxu0 0.0
    %211 = vmatpush1.msra.mxu0 0.0
    %212 = vmatprep.subr.mxu0 0.0
    %213 = vmatpush1.msra.mxu0 0.0
    %214 = vmatprep.subr.mxu0 0.0
    %215 = vmatpush1.msra.mxu0 0.0
    %216 = vmatprep.subr.mxu0 0.0
    %217 = vmatpush1.msra.mxu0 0.0
    %218 = vmatprep.subr.mxu0 0.0
    %219 = vmatpush1.msra.mxu0 0.0
    %220 = vmatprep.subr.mxu0 0.0
    %221 = vmatpush1.msra.mxu0 0.0
    %222 = vmatprep.subr.mxu0 0.0
    %223 = vmatpush1.msra.mxu0 0.0
    %224 = vmatprep.subr.mxu0 0.0
    %225 = vmatpush1.msra.mxu0 0.0
    %226 = vmatprep.subr.mxu0 0.0
    %227 = vmatpush1.msra.mxu0 0.0
    %228 = vmatprep.subr.mxu0 0.0
    %229 = vmatpush1.msra.mxu0 0.0
    %230 = vmatprep.subr.mxu0 0.0
    %231 = vmatpush1.msra.mxu0 0.0
    %232 = vmatprep.subr.mxu0 0.0
    %233 = vmatpush1.msra.mxu0 0.0
    %234 = vmatprep.mubr.f32.mxu0 0.0
    %235 = vmatmul.mubr.f32.gmra.mrb[0].mxu0 %v147
    %v236 = vpop.f32.mrb[0].mxu0
    %v237 = vadd.f32 0.0, %v236
    %v238 = vpop.f32.mrb[0].mxu0
    %239 = vmatprep.mubr.f32.mxu0 0.0
    %240 = vmatmul.mubr.f32.gmra.mrb[0].mxu0 %v150
    %v241 = vpop.f32.mrb[0].mxu0
    %v242 = vadd.f32 0.0, %v241
    %v243 = vpop.f32.mrb[0].mxu0
    %244 = vmatprep.mubr.f32.mxu0 0.0
    %245 = vmatmul.mubr.f32.gmra.mrb[0].mxu0 %v153
    %v246 = vpop.f32.mrb[0].mxu0
    %v247 = vadd.f32 0.0, %v246
    %v248 = vpop.f32.mrb[0].mxu0
    %249 = vmatprep.mubr.f32.mxu0 0.0
    %250 = vmatmul.mubr.f32.gmra.mrb[0].mxu0 %v156
    %v251 = vpop.f32.mrb[0].mxu0
    %v252 = vadd.f32 0.0, %v251
    %v253 = vpop.f32.mrb[0].mxu0
    %254 = vmatprep.mubr.f32.mxu0 0.0
    %255 = vmatmul.mubr.f32.gmra.mrb[0].mxu0 %v159
    %v256 = vpop.f32.mrb[0].mxu0
    %v257 = vadd.f32 0.0, %v256
    %v258 = vpop.f32.mrb[0].mxu0
    %259 = vmatprep.mubr.f32.mxu0 0.0
    %260 = vmatmul.mubr.f32.gmra.mrb[0].mxu0 %v162
    %v261 = vpop.f32.mrb[0].mxu0
    %v262 = vadd.f32 0.0, %v261
    %v263 = vpop.f32.mrb[0].mxu0
    %264 = vmatprep.mubr.f32.mxu0 0.0
    %265 = vmatmul.mubr.f32.gmra.mrb[0].mxu0 %v165
    %v266 = vpop.f32.mrb[0].mxu0
    %v267 = vadd.f32 0.0, %v266
    %v268 = vpop.f32.mrb[0].mxu0
    %269 = vmatprep.mubr.f32.mxu0 0.0
    %270 = vmatmul.mubr.f32.gmra.mrb[0].mxu0 %v168
    %v271 = vpop.f32.mrb[0].mxu0
    %v272 = vadd.f32 0.0, %v271
    %v273 = vpop.f32.mrb[0].mxu0
    %274 = vdwg.mxu0
    %v275 = vmul.f32 %v237, %v129
    %v276 = vmul.f32 %v242, %v130
    %v277 = vmul.f32 %v247, %v131
    %v278 = vmul.f32 %v252, %v132
    %v279 = vmul.f32 %v257, %v133
    %v280 = vmul.f32 %v262, %v134
    %v281 = vmul.f32 %v267, %v135
    %v282 = vmul.f32 %v272, %v136
    %v283 = vld [vmem:[%s1] sm:$0xff]
    %v284 = vld [vmem:[%s1 + $0x8] sm:$0xff]
    %v285 = vld [vmem:[%s1 + $0x10] sm:$0xff]
    %v286 = vld [vmem:[%s1 + $0x18] sm:$0xff]
    %v287 = vld [vmem:[%s1 + $0x20] sm:$0xff]
    %v288 = vld [vmem:[%s1 + $0x28] sm:$0xff]
    %v289 = vld [vmem:[%s1 + $0x30] sm:$0xff]
    %v290 = vld [vmem:[%s1 + $0x38] sm:$0xff]
    %293 = vrot.lane.b32.xlu0 %v121, 96
    %v294 = vpop.permute.xlu0 %293
    %295 = vrot.lane.b32.xlu0 %v126, 96
    %v296 = vpop.permute.xlu0 %295
    %v298 = vsel %vm47, %v275, 0
    %v301 = vsel %vm47, %v276, 0
    %v304 = vsel %vm47, %v277, 0
    %v307 = vsel %vm47, %v278, 0
    %v310 = vsel %vm47, %v279, 0
    %v313 = vsel %vm47, %v280, 0
    %v316 = vsel %vm47, %v281, 0
    %v319 = vsel %vm47, %v282, 0
    %v321 = vsel %vm47, %v294, 0
    %v323 = vsel %vm47, %v296, 0
    %325 = vmatprep.subr.mxu0 0.0
    %326 = vmatpush1.xpose.msra.mxu0 %v321
    %327 = vmatprep.subr.mxu0 0.0
    %328 = vmatpush1.xpose.msra.mxu0 %v323
    %329 = vmatprep.subr.mxu0 0.0
    %330 = vmatpush1.xpose.msra.mxu0 0.0
    %331 = vmatprep.subr.mxu0 0.0
    %332 = vmatpush1.xpose.msra.mxu0 0.0
    %333 = vmatprep.subr.mxu0 0.0
    %334 = vmatpush1.xpose.msra.mxu0 0.0
    %335 = vmatprep.subr.mxu0 0.0
    %336 = vmatpush1.xpose.msra.mxu0 0.0
    %337 = vmatprep.subr.mxu0 0.0
    %338 = vmatpush1.xpose.msra.mxu0 0.0
    %339 = vmatprep.subr.mxu0 0.0
    %340 = vmatpush1.xpose.msra.mxu0 0.0
    %341 = vmatprep.subr.mxu0 0.0
    %342 = vmatpush1.xpose.msra.mxu0 0.0
    %343 = vmatprep.subr.mxu0 0.0
    %344 = vmatpush1.xpose.msra.mxu0 0.0
    %345 = vmatprep.subr.mxu0 0.0
    %346 = vmatpush1.xpose.msra.mxu0 0.0
    %347 = vmatprep.subr.mxu0 0.0
    %348 = vmatpush1.xpose.msra.mxu0 0.0
    %349 = vmatprep.subr.mxu0 0.0
    %350 = vmatpush1.xpose.msra.mxu0 0.0
    %351 = vmatprep.subr.mxu0 0.0
    %352 = vmatpush1.xpose.msra.mxu0 0.0
    %353 = vmatprep.subr.mxu0 0.0
    %354 = vmatpush1.xpose.msra.mxu0 0.0
    %355 = vmatprep.subr.mxu0 0.0
    %356 = vmatpush1.xpose.msra.mxu0 0.0
    %357 = vmatprep.subr.mxu0 0.0
    %358 = vmatpush1.xpose.msra.mxu0 0.0
    %359 = vmatprep.subr.mxu0 0.0
    %360 = vmatpush1.xpose.msra.mxu0 0.0
    %361 = vmatprep.subr.mxu0 0.0
    %362 = vmatpush1.xpose.msra.mxu0 0.0
    %363 = vmatprep.subr.mxu0 0.0
    %364 = vmatpush1.xpose.msra.mxu0 0.0
    %365 = vmatprep.subr.mxu0 0.0
    %366 = vmatpush1.xpose.msra.mxu0 0.0
    %367 = vmatprep.subr.mxu0 0.0
    %368 = vmatpush1.xpose.msra.mxu0 0.0
    %369 = vmatprep.subr.mxu0 0.0
    %370 = vmatpush1.xpose.msra.mxu0 0.0
    %371 = vmatprep.subr.mxu0 0.0
    %372 = vmatpush1.xpose.msra.mxu0 0.0
    %373 = vmatprep.subr.mxu0 0.0
    %374 = vmatpush1.xpose.msra.mxu0 0.0
    %375 = vmatprep.subr.mxu0 0.0
    %376 = vmatpush1.xpose.msra.mxu0 0.0
    %377 = vmatprep.subr.mxu0 0.0
    %378 = vmatpush1.xpose.msra.mxu0 0.0
    %379 = vmatprep.subr.mxu0 0.0
    %380 = vmatpush1.xpose.msra.mxu0 0.0
    %381 = vmatprep.subr.mxu0 0.0
    %382 = vmatpush1.xpose.msra.mxu0 0.0
    %383 = vmatprep.subr.mxu0 0.0
    %384 = vmatpush1.xpose.msra.mxu0 0.0
    %385 = vmatprep.subr.mxu0 0.0
    %386 = vmatpush1.xpose.msra.mxu0 0.0
    %387 = vmatprep.subr.mxu0 0.0
    %388 = vmatpush1.xpose.msra.mxu0 0.0
    %389 = vmatprep.mubr.f32.mxu0 0.0
    %390 = vmatmul.mubr.f32.gmra.mrb[0].mxu0 %v298
    %v391 = vpop.f32.mrb[0].mxu0
    %v392 = vadd.f32 %v283, %v391
    %v393 = vpop.f32.mrb[0].mxu0
    %394 = vmatprep.mubr.f32.mxu0 0.0
    %395 = vmatmul.mubr.f32.gmra.mrb[0].mxu0 %v301
    %v396 = vpop.f32.mrb[0].mxu0
    %v397 = vadd.f32 %v284, %v396
    %v398 = vpop.f32.mrb[0].mxu0
    %399 = vmatprep.mubr.f32.mxu0 0.0
    %400 = vmatmul.mubr.f32.gmra.mrb[0].mxu0 %v304
    %v401 = vpop.f32.mrb[0].mxu0
    %v402 = vadd.f32 %v285, %v401
    %v403 = vpop.f32.mrb[0].mxu0
    %404 = vmatprep.mubr.f32.mxu0 0.0
    %405 = vmatmul.mubr.f32.gmra.mrb[0].mxu0 %v307
    %v406 = vpop.f32.mrb[0].mxu0
    %v407 = vadd.f32 %v286, %v406
    %v408 = vpop.f32.mrb[0].mxu0
    %409 = vmatprep.mubr.f32.mxu0 0.0
    %410 = vmatmul.mubr.f32.gmra.mrb[0].mxu0 %v310
    %v411 = vpop.f32.mrb[0].mxu0
    %v412 = vadd.f32 %v287, %v411
    %v413 = vpop.f32.mrb[0].mxu0
    %414 = vmatprep.mubr.f32.mxu0 0.0
    %415 = vmatmul.mubr.f32.gmra.mrb[0].mxu0 %v313
    %v416 = vpop.f32.mrb[0].mxu0
    %v417 = vadd.f32 %v288, %v416
    %v418 = vpop.f32.mrb[0].mxu0
    %419 = vmatprep.mubr.f32.mxu0 0.0
    %420 = vmatmul.mubr.f32.gmra.mrb[0].mxu0 %v316
    %v421 = vpop.f32.mrb[0].mxu0
    %v422 = vadd.f32 %v289, %v421
    %v423 = vpop.f32.mrb[0].mxu0
    %424 = vmatprep.mubr.f32.mxu0 0.0
    %425 = vmatmul.mubr.f32.gmra.mrb[0].mxu0 %v319
    %v426 = vpop.f32.mrb[0].mxu0
    %v427 = vadd.f32 %v290, %v426
    %v428 = vpop.f32.mrb[0].mxu0
    %429 = vdwg.mxu0
    %v430 = vsel %vm145, %v392, -inf
    %431 = vmax.xlane.f32.xlu0 %v430
    %v432 = vpop.xlane.xlu0 %431
    %v433 = vsel %vm145, %v397, -inf
    %434 = vmax.xlane.f32.xlu0 %v433
    %v435 = vpop.xlane.xlu0 %434
    %v436 = vsel %vm145, %v402, -inf
    %437 = vmax.xlane.f32.xlu0 %v436
    %v438 = vpop.xlane.xlu0 %437
    %v439 = vsel %vm145, %v407, -inf
    %440 = vmax.xlane.f32.xlu0 %v439
    %v441 = vpop.xlane.xlu0 %440
    %v442 = vsel %vm145, %v412, -inf
    %443 = vmax.xlane.f32.xlu0 %v442
    %v444 = vpop.xlane.xlu0 %443
    %v445 = vsel %vm145, %v417, -inf
    %446 = vmax.xlane.f32.xlu0 %v445
    %v447 = vpop.xlane.xlu0 %446
    %v448 = vsel %vm145, %v422, -inf
    %449 = vmax.xlane.f32.xlu0 %v448
    %v450 = vpop.xlane.xlu0 %449
    %v451 = vsel %vm145, %v427, -inf
    %452 = vmax.xlane.f32.xlu0 %v451
    %v453 = vpop.xlane.xlu0 %452
    %v454 = vsub.f32 %v392, %v432
    %v455 = vsub.f32 %v397, %v435
    %v456 = vsub.f32 %v402, %v438
    %v457 = vsub.f32 %v407, %v441
    %v458 = vsub.f32 %v412, %v444
    %v459 = vsub.f32 %v417, %v447
    %v460 = vsub.f32 %v422, %v450
    %v461 = vsub.f32 %v427, %v453
    %v462 = vmul.f32 %v454, 1.442695
    %v463 = vpow.pop %v462
    %v464 = vmul.f32 %v455, 1.442695
    %v465 = vpow.pop %v464
    %v466 = vmul.f32 %v456, 1.442695
    %v467 = vpow.pop %v466
    %v468 = vmul.f32 %v457, 1.442695
    %v469 = vpow.pop %v468
    %v470 = vmul.f32 %v458, 1.442695
    %v471 = vpow.pop %v470
    %v472 = vmul.f32 %v459, 1.442695
    %v473 = vpow.pop %v472
    %v474 = vmul.f32 %v460, 1.442695
    %v475 = vpow.pop %v474
    %v476 = vmul.f32 %v461, 1.442695
    %v477 = vpow.pop %v476
    %v478 = vsel %vm145, %v463, 0.0
    %479 = vadd.xlane.f32.xlu0 %v478
    %v480 = vpop.xlane.xlu0 %479
    %v481 = vsel %vm145, %v465, 0.0
    %482 = vadd.xlane.f32.xlu0 %v481
    %v483 = vpop.xlane.xlu0 %482
    %v484 = vsel %vm145, %v467, 0.0
    %485 = vadd.xlane.f32.xlu0 %v484
    %v486 = vpop.xlane.xlu0 %485
    %v487 = vsel %vm145, %v469, 0.0
    %488 = vadd.xlane.f32.xlu0 %v487
    %v489 = vpop.xlane.xlu0 %488
    %v490 = vsel %vm145, %v471, 0.0
    %491 = vadd.xlane.f32.xlu0 %v490
    %v492 = vpop.xlane.xlu0 %491
    %v493 = vsel %vm145, %v473, 0.0
    %494 = vadd.xlane.f32.xlu0 %v493
    %v495 = vpop.xlane.xlu0 %494
    %v496 = vsel %vm145, %v475, 0.0
    %497 = vadd.xlane.f32.xlu0 %v496
    %v498 = vpop.xlane.xlu0 %497
    %v499 = vsel %vm145, %v477, 0.0
    %500 = vadd.xlane.f32.xlu0 %v499
    %v501 = vpop.xlane.xlu0 %500
    %v502 = vrcp.pop %v480
    %v503 = vrcp.pop %v483
    %v504 = vrcp.pop %v486
    %v505 = vrcp.pop %v489
    %v506 = vrcp.pop %v492
    %v507 = vrcp.pop %v495
    %v508 = vrcp.pop %v498
    %v509 = vrcp.pop %v501
    %v510 = vmul.f32 %v463, %v502
    %v511 = vmul.f32 %v465, %v503
    %v512 = vmul.f32 %v467, %v504
    %v513 = vmul.f32 %v469, %v505
    %v514 = vmul.f32 %v471, %v506
    %v515 = vmul.f32 %v473, %v507
    %v516 = vmul.f32 %v475, %v508
    %v517 = vmul.f32 %v477, %v509
    %518 = vrot.lane.b32.xlu0 %v121, 64
    %v519 = vpop.permute.xlu0 %518
    %520 = vrot.lane.b32.xlu0 %v126, 64
    %v521 = vpop.permute.xlu0 %520
    %v525 = vsel %vm145, %v510, 0
    %v528 = vsel %vm145, %v511, 0
    %v531 = vsel %vm145, %v512, 0
    %v534 = vsel %vm145, %v513, 0
    %v537 = vsel %vm145, %v514, 0
    %v540 = vsel %vm145, %v515, 0
    %v543 = vsel %vm145, %v516, 0
    %v546 = vsel %vm145, %v517, 0
    %548 = vmatprep.subr.mxu0 0.0
    %549 = vmatpush1.msra.mxu0 %v519
    %550 = vmatprep.subr.mxu0 0.0
    %551 = vmatpush1.msra.mxu0 %v521
    %552 = vmatprep.subr.mxu0 0.0
    %553 = vmatpush1.msra.mxu0 0.0
    %554 = vmatprep.subr.mxu0 0.0
    %555 = vmatpush1.msra.mxu0 0.0
    %556 = vmatprep.subr.mxu0 0.0
    %557 = vmatpush1.msra.mxu0 0.0
    %558 = vmatprep.subr.mxu0 0.0
    %559 = vmatpush1.msra.mxu0 0.0
    %560 = vmatprep.subr.mxu0 0.0
    %561 = vmatpush1.msra.mxu0 0.0
    %562 = vmatprep.subr.mxu0 0.0
    %563 = vmatpush1.msra.mxu0 0.0
    %564 = vmatprep.subr.mxu0 0.0
    %565 = vmatpush1.msra.mxu0 0.0
    %566 = vmatprep.subr.mxu0 0.0
    %567 = vmatpush1.msra.mxu0 0.0
    %568 = vmatprep.subr.mxu0 0.0
    %569 = vmatpush1.msra.mxu0 0.0
    %570 = vmatprep.subr.mxu0 0.0
    %571 = vmatpush1.msra.mxu0 0.0
    %572 = vmatprep.subr.mxu0 0.0
    %573 = vmatpush1.msra.mxu0 0.0
    %574 = vmatprep.subr.mxu0 0.0
    %575 = vmatpush1.msra.mxu0 0.0
    %576 = vmatprep.subr.mxu0 0.0
    %577 = vmatpush1.msra.mxu0 0.0
    %578 = vmatprep.subr.mxu0 0.0
    %579 = vmatpush1.msra.mxu0 0.0
    %580 = vmatprep.subr.mxu0 0.0
    %581 = vmatpush1.msra.mxu0 0.0
    %582 = vmatprep.subr.mxu0 0.0
    %583 = vmatpush1.msra.mxu0 0.0
    %584 = vmatprep.subr.mxu0 0.0
    %585 = vmatpush1.msra.mxu0 0.0
    %586 = vmatprep.subr.mxu0 0.0
    %587 = vmatpush1.msra.mxu0 0.0
    %588 = vmatprep.subr.mxu0 0.0
    %589 = vmatpush1.msra.mxu0 0.0
    %590 = vmatprep.subr.mxu0 0.0
    %591 = vmatpush1.msra.mxu0 0.0
    %592 = vmatprep.subr.mxu0 0.0
    %593 = vmatpush1.msra.mxu0 0.0
    %594 = vmatprep.subr.mxu0 0.0
    %595 = vmatpush1.msra.mxu0 0.0
    %596 = vmatprep.subr.mxu0 0.0
    %597 = vmatpush1.msra.mxu0 0.0
    %598 = vmatprep.subr.mxu0 0.0
    %599 = vmatpush1.msra.mxu0 0.0
    %600 = vmatprep.subr.mxu0 0.0
    %601 = vmatpush1.msra.mxu0 0.0
    %602 = vmatprep.subr.mxu0 0.0
    %603 = vmatpush1.msra.mxu0 0.0
    %604 = vmatprep.subr.mxu0 0.0
    %605 = vmatpush1.msra.mxu0 0.0
    %606 = vmatprep.subr.mxu0 0.0
    %607 = vmatpush1.msra.mxu0 0.0
    %608 = vmatprep.subr.mxu0 0.0
    %609 = vmatpush1.msra.mxu0 0.0
    %610 = vmatprep.subr.mxu0 0.0
    %611 = vmatpush1.msra.mxu0 0.0
    %612 = vmatprep.mubr.f32.mxu0 0.0
    %613 = vmatmul.mubr.f32.gmra.mrb[0].mxu0 %v525
    %v614 = vpop.f32.mrb[0].mxu0
    %v615 = vadd.f32 0.0, %v614
    %v616 = vpop.f32.mrb[0].mxu0
    %617 = vmatprep.mubr.f32.mxu0 0.0
    %618 = vmatmul.mubr.f32.gmra.mrb[0].mxu0 %v528
    %v619 = vpop.f32.mrb[0].mxu0
    %v620 = vadd.f32 0.0, %v619
    %v621 = vpop.f32.mrb[0].mxu0
    %622 = vmatprep.mubr.f32.mxu0 0.0
    %623 = vmatmul.mubr.f32.gmra.mrb[0].mxu0 %v531
    %v624 = vpop.f32.mrb[0].mxu0
    %v625 = vadd.f32 0.0, %v624
    %v626 = vpop.f32.mrb[0].mxu0
    %627 = vmatprep.mubr.f32.mxu0 0.0
    %628 = vmatmul.mubr.f32.gmra.mrb[0].mxu0 %v534
    %v629 = vpop.f32.mrb[0].mxu0
    %v630 = vadd.f32 0.0, %v629
    %v631 = vpop.f32.mrb[0].mxu0
    %632 = vmatprep.mubr.f32.mxu0 0.0
    %633 = vmatmul.mubr.f32.gmra.mrb[0].mxu0 %v537
    %v634 = vpop.f32.mrb[0].mxu0
    %v635 = vadd.f32 0.0, %v634
    %v636 = vpop.f32.mrb[0].mxu0
    %637 = vmatprep.mubr.f32.mxu0 0.0
    %638 = vmatmul.mubr.f32.gmra.mrb[0].mxu0 %v540
    %v639 = vpop.f32.mrb[0].mxu0
    %v640 = vadd.f32 0.0, %v639
    %v641 = vpop.f32.mrb[0].mxu0
    %642 = vmatprep.mubr.f32.mxu0 0.0
    %643 = vmatmul.mubr.f32.gmra.mrb[0].mxu0 %v543
    %v644 = vpop.f32.mrb[0].mxu0
    %v645 = vadd.f32 0.0, %v644
    %v646 = vpop.f32.mrb[0].mxu0
    %647 = vmatprep.mubr.f32.mxu0 0.0
    %648 = vmatmul.mubr.f32.gmra.mrb[0].mxu0 %v546
    %v649 = vpop.f32.mrb[0].mxu0
    %v650 = vadd.f32 0.0, %v649
    %v651 = vpop.f32.mrb[0].mxu0
    %652 = vdwg.mxu0
    %v653 = vmul.f32 %v615, %v129
    %v654 = vmul.f32 %v620, %v130
    %v655 = vmul.f32 %v625, %v131
    %v656 = vmul.f32 %v630, %v132
    %v657 = vmul.f32 %v635, %v133
    %v658 = vmul.f32 %v640, %v134
    %v659 = vmul.f32 %v645, %v135
    %v660 = vmul.f32 %v650, %v136
    %v661 = vld [vmem:[%s4] sm:$0xff]
    %v662 = vld [vmem:[%s4 + $0x8] sm:$0xff]
    %vm663 = vcmask 523264
    %v665 = vsel %vm663, %v661, 0
    %v668 = vsel %vm663, %v662, 0
    %670 = vmatprep.subr.mxu0 0.0
    %671 = vmatpush1.msra.mxu0 %v653
    %672 = vmatprep.subr.mxu0 0.0
    %673 = vmatpush1.msra.mxu0 %v654
    %674 = vmatprep.subr.mxu0 0.0
    %675 = vmatpush1.msra.mxu0 %v655
    %676 = vmatprep.subr.mxu0 0.0
    %677 = vmatpush1.msra.mxu0 %v656
    %678 = vmatprep.subr.mxu0 0.0
    %679 = vmatpush1.msra.mxu0 %v657
    %680 = vmatprep.subr.mxu0 0.0
    %681 = vmatpush1.msra.mxu0 %v658
    %682 = vmatprep.subr.mxu0 0.0
    %683 = vmatpush1.msra.mxu0 %v659
    %684 = vmatprep.subr.mxu0 0.0
    %685 = vmatpush1.msra.mxu0 %v660
    %686 = vmatprep.subr.mxu0 0.0
    %687 = vmatpush1.msra.mxu0 0.0
    %688 = vmatprep.subr.mxu0 0.0
    %689 = vmatpush1.msra.mxu0 0.0
    %690 = vmatprep.subr.mxu0 0.0
    %691 = vmatpush1.msra.mxu0 0.0
    %692 = vmatprep.subr.mxu0 0.0
    %693 = vmatpush1.msra.mxu0 0.0
    %694 = vmatprep.subr.mxu0 0.0
    %695 = vmatpush1.msra.mxu0 0.0
    %696 = vmatprep.subr.mxu0 0.0
    %697 = vmatpush1.msra.mxu0 0.0
    %698 = vmatprep.subr.mxu0 0.0
    %699 = vmatpush1.msra.mxu0 0.0
    %700 = vmatprep.subr.mxu0 0.0
    %701 = vmatpush1.msra.mxu0 0.0
    %702 = vmatprep.subr.mxu0 0.0
    %703 = vmatpush1.msra.mxu0 0.0
    %704 = vmatprep.subr.mxu0 0.0
    %705 = vmatpush1.msra.mxu0 0.0
    %706 = vmatprep.subr.mxu0 0.0
    %707 = vmatpush1.msra.mxu0 0.0
    %708 = vmatprep.subr.mxu0 0.0
    %709 = vmatpush1.msra.mxu0 0.0
    %710 = vmatprep.subr.mxu0 0.0
    %711 = vmatpush1.msra.mxu0 0.0
    %712 = vmatprep.subr.mxu0 0.0
    %713 = vmatpush1.msra.mxu0 0.0
    %714 = vmatprep.subr.mxu0 0.0
    %715 = vmatpush1.msra.mxu0 0.0
    %716 = vmatprep.subr.mxu0 0.0
    %717 = vmatpush1.msra.mxu0 0.0
    %718 = vmatprep.subr.mxu0 0.0
    %719 = vmatpush1.msra.mxu0 0.0
    %720 = vmatprep.subr.mxu0 0.0
    %721 = vmatpush1.msra.mxu0 0.0
    %722 = vmatprep.subr.mxu0 0.0
    %723 = vmatpush1.msra.mxu0 0.0
    %724 = vmatprep.subr.mxu0 0.0
    %725 = vmatpush1.msra.mxu0 0.0
    %726 = vmatprep.subr.mxu0 0.0
    %727 = vmatpush1.msra.mxu0 0.0
    %728 = vmatprep.subr.mxu0 0.0
    %729 = vmatpush1.msra.mxu0 0.0
    %730 = vmatprep.subr.mxu0 0.0
    %731 = vmatpush1.msra.mxu0 0.0
    %732 = vmatprep.subr.mxu0 0.0
    %733 = vmatpush1.msra.mxu0 0.0
    %734 = vmatprep.mubr.f32.mxu0 0.0
    %735 = vmatmul.mubr.f32.gmra.mrb[0].mxu0 %v665
    %v736 = vpop.f32.mrb[0].mxu0
    %v737 = vadd.f32 0.0, %v736
    %v738 = vpop.f32.mrb[0].mxu0
    %739 = vmatprep.mubr.f32.mxu0 0.0
    %740 = vmatmul.mubr.f32.gmra.mrb[0].mxu0 %v668
    %v741 = vpop.f32.mrb[0].mxu0
    %v742 = vadd.f32 0.0, %v741
    %v743 = vpop.f32.mrb[0].mxu0
    %744 = vdwg.mxu0
    %v745 = vld [vmem:[%s6] sm:$0xff]
    %v746 = vld [vmem:[%s6 + $0x8] sm:$0xff]
    %v747 = vld [vmem:[%s6 + $0x10] sm:$0xff]
    %v748 = vld [vmem:[%s6 + $0x18] sm:$0xff]
    %v749 = vlaneseq
    %v750 = vshrl.u32 %v749, 7
    %v751 = vsub.s32 1, %v750
    %v752 = vrot.slane %v38, %v751
    %v754 = vsel %vm47, %v737, 0
    %v757 = vsel %vm47, %v742, 0
    %759 = vmatprep.subr.mxu0 0.0
    %760 = vmatpush1.msra.mxu0 %v745
    %761 = vmatprep.subr.mxu0 0.0
    %762 = vmatpush1.msra.mxu0 %v746
    %763 = vmatprep.subr.mxu0 0.0
    %764 = vmatpush1.msra.mxu0 %v747
    %765 = vmatprep.subr.mxu0 0.0
    %766 = vmatpush1.msra.mxu0 %v748
    %767 = vmatprep.subr.mxu0 0.0
    %768 = vmatpush1.msra.mxu0 0.0
    %769 = vmatprep.subr.mxu0 0.0
    %770 = vmatpush1.msra.mxu0 0.0
    %771 = vmatprep.subr.mxu0 0.0
    %772 = vmatpush1.msra.mxu0 0.0
    %773 = vmatprep.subr.mxu0 0.0
    %774 = vmatpush1.msra.mxu0 0.0
    %775 = vmatprep.subr.mxu0 0.0
    %776 = vmatpush1.msra.mxu0 0.0
    %777 = vmatprep.subr.mxu0 0.0
    %778 = vmatpush1.msra.mxu0 0.0
    %779 = vmatprep.subr.mxu0 0.0
    %780 = vmatpush1.msra.mxu0 0.0
    %781 = vmatprep.subr.mxu0 0.0
    %782 = vmatpush1.msra.mxu0 0.0
    %783 = vmatprep.subr.mxu0 0.0
    %784 = vmatpush1.msra.mxu0 0.0
    %785 = vmatprep.subr.mxu0 0.0
    %786 = vmatpush1.msra.mxu0 0.0
    %787 = vmatprep.subr.mxu0 0.0
    %788 = vmatpush1.msra.mxu0 0.0
    %789 = vmatprep.subr.mxu0 0.0
    %790 = vmatpush1.msra.mxu0 0.0
    %791 = vmatprep.subr.mxu0 0.0
    %792 = vmatpush1.msra.mxu0 0.0
    %793 = vmatprep.subr.mxu0 0.0
    %794 = vmatpush1.msra.mxu0 0.0
    %795 = vmatprep.subr.mxu0 0.0
    %796 = vmatpush1.msra.mxu0 0.0
    %797 = vmatprep.subr.mxu0 0.0
    %798 = vmatpush1.msra.mxu0 0.0
    %799 = vmatprep.subr.mxu0 0.0
    %800 = vmatpush1.msra.mxu0 0.0
    %801 = vmatprep.subr.mxu0 0.0
    %802 = vmatpush1.msra.mxu0 0.0
    %803 = vmatprep.subr.mxu0 0.0
    %804 = vmatpush1.msra.mxu0 0.0
    %805 = vmatprep.subr.mxu0 0.0
    %806 = vmatpush1.msra.mxu0 0.0
    %807 = vmatprep.subr.mxu0 0.0
    %808 = vmatpush1.msra.mxu0 0.0
    %809 = vmatprep.subr.mxu0 0.0
    %810 = vmatpush1.msra.mxu0 0.0
    %811 = vmatprep.subr.mxu0 0.0
    %812 = vmatpush1.msra.mxu0 0.0
    %813 = vmatprep.subr.mxu0 0.0
    %814 = vmatpush1.msra.mxu0 0.0
    %815 = vmatprep.subr.mxu0 0.0
    %816 = vmatpush1.msra.mxu0 0.0
    %817 = vmatprep.subr.mxu0 0.0
    %818 = vmatpush1.msra.mxu0 0.0
    %819 = vmatprep.subr.mxu0 0.0
    %820 = vmatpush1.msra.mxu0 0.0
    %821 = vmatprep.subr.mxu0 0.0
    %822 = vmatpush1.msra.mxu0 0.0
    %823 = vmatprep.mubr.f32.mxu0 0.0
    %824 = vmatmul.mubr.f32.gmra.mrb[0].mxu0 %v754
    %v825 = vpop.f32.mrb[0].mxu0
    %v826 = vadd.f32 %v752, %v825
    %v827 = vpop.f32.mrb[0].mxu0
    %828 = vmatprep.mubr.f32.mxu0 0.0
    %829 = vmatmul.mubr.f32.gmra.mrb[0].mxu0 %v757
    %v830 = vpop.f32.mrb[0].mxu0
    %v831 = vadd.f32 %v752, %v830
    %v832 = vpop.f32.mrb[0].mxu0
    %833 = vdwg.mxu0
    %v834 = vadd.f32 %v826, %v36
    %v835 = vadd.f32 %v831, %v37
    %v836 = vsel %vm47, %v834, 0.0
    %837 = vadd.xlane.f32.xlu0 %v836
    %v838 = vpop.xlane.xlu0 %837
    %v839 = vsel %vm47, %v835, 0.0
    %840 = vadd.xlane.f32.xlu0 %v839
    %v841 = vpop.xlane.xlu0 %840
    %v842 = vrcp.pop 32.0
    %v843 = vmul.f32 %v838, %v842
    %v844 = vmul.f32 %v841, %v842
    %v845 = vsub.f32 %v834, %v843
    %v846 = vsub.f32 %v835, %v844
    %v847 = vmul.f32 %v845, %v845
    %v848 = vmul.f32 %v846, %v846
    %v849 = vsel %vm47, %v847, 0.0
    %850 = vadd.xlane.f32.xlu0 %v849
    %v851 = vpop.xlane.xlu0 %850
    %v852 = vsel %vm47, %v848, 0.0
    %853 = vadd.xlane.f32.xlu0 %v852
    %v854 = vpop.xlane.xlu0 %853
    %v855 = vmul.f32 %v851, %v842
    %v856 = vmul.f32 %v854, %v842
    %v857 = vadd.f32 %v855, 1e-12
    %v858 = vadd.f32 %v856, 1e-12
    %v859 = vrsqrt.pop %v857
    %v860 = vrsqrt.pop %v858
    %v861 = vmul.f32 %v845, %v859
    %v862 = vmul.f32 %v846, %v860
    %v863 = vlaneseq
    %v864 = vshrl.u32 %v863, 7
    %v865 = vsub.s32 2, %v864
    %v866 = vrot.slane %v38, %v865
    %v867 = vmul.f32 %v861, %v866
    %v868 = vmul.f32 %v862, %v866
    %v869 = vlaneseq
    %v870 = vshrl.u32 %v869, 7
    %v871 = vsub.s32 3, %v870
    %v872 = vrot.slane %v38, %v871
    %v873 = vadd.f32 %v867, %v872
    %v874 = vadd.f32 %v868, %v872
    %v875 = vld [vmem:[%s7] sm:$0xff]
    %v876 = vld [vmem:[%s7 + $0x8] sm:$0xff]
    %v877 = vld [vmem:[%s7 + $0x10] sm:$0xff]
    %v878 = vld [vmem:[%s7 + $0x18] sm:$0xff]
    %v879 = vlaneseq
    %v880 = vshrl.u32 %v879, 7
    %v881 = vsub.s32 4, %v880
    %v882 = vrot.slane %v38, %v881
    %v884 = vsel %vm47, %v873, 0
    %v887 = vsel %vm47, %v874, 0
    %889 = vmatprep.subr.mxu0 0.0
    %890 = vmatpush1.msra.mxu0 %v875
    %891 = vmatprep.subr.mxu0 0.0
    %892 = vmatpush1.msra.mxu0 %v876
    %893 = vmatprep.subr.mxu0 0.0
    %894 = vmatpush1.msra.mxu0 %v877
    %895 = vmatprep.subr.mxu0 0.0
    %896 = vmatpush1.msra.mxu0 %v878
    %897 = vmatprep.subr.mxu0 0.0
    %898 = vmatpush1.msra.mxu0 0.0
    %899 = vmatprep.subr.mxu0 0.0
    %900 = vmatpush1.msra.mxu0 0.0
    %901 = vmatprep.subr.mxu0 0.0
    %902 = vmatpush1.msra.mxu0 0.0
    %903 = vmatprep.subr.mxu0 0.0
    %904 = vmatpush1.msra.mxu0 0.0
    %905 = vmatprep.subr.mxu0 0.0
    %906 = vmatpush1.msra.mxu0 0.0
    %907 = vmatprep.subr.mxu0 0.0
    %908 = vmatpush1.msra.mxu0 0.0
    %909 = vmatprep.subr.mxu0 0.0
    %910 = vmatpush1.msra.mxu0 0.0
    %911 = vmatprep.subr.mxu0 0.0
    %912 = vmatpush1.msra.mxu0 0.0
    %913 = vmatprep.subr.mxu0 0.0
    %914 = vmatpush1.msra.mxu0 0.0
    %915 = vmatprep.subr.mxu0 0.0
    %916 = vmatpush1.msra.mxu0 0.0
    %917 = vmatprep.subr.mxu0 0.0
    %918 = vmatpush1.msra.mxu0 0.0
    %919 = vmatprep.subr.mxu0 0.0
    %920 = vmatpush1.msra.mxu0 0.0
    %921 = vmatprep.subr.mxu0 0.0
    %922 = vmatpush1.msra.mxu0 0.0
    %923 = vmatprep.subr.mxu0 0.0
    %924 = vmatpush1.msra.mxu0 0.0
    %925 = vmatprep.subr.mxu0 0.0
    %926 = vmatpush1.msra.mxu0 0.0
    %927 = vmatprep.subr.mxu0 0.0
    %928 = vmatpush1.msra.mxu0 0.0
    %929 = vmatprep.subr.mxu0 0.0
    %930 = vmatpush1.msra.mxu0 0.0
    %931 = vmatprep.subr.mxu0 0.0
    %932 = vmatpush1.msra.mxu0 0.0
    %933 = vmatprep.subr.mxu0 0.0
    %934 = vmatpush1.msra.mxu0 0.0
    %935 = vmatprep.subr.mxu0 0.0
    %936 = vmatpush1.msra.mxu0 0.0
    %937 = vmatprep.subr.mxu0 0.0
    %938 = vmatpush1.msra.mxu0 0.0
    %939 = vmatprep.subr.mxu0 0.0
    %940 = vmatpush1.msra.mxu0 0.0
    %941 = vmatprep.subr.mxu0 0.0
    %942 = vmatpush1.msra.mxu0 0.0
    %943 = vmatprep.subr.mxu0 0.0
    %944 = vmatpush1.msra.mxu0 0.0
    %945 = vmatprep.subr.mxu0 0.0
    %946 = vmatpush1.msra.mxu0 0.0
    %947 = vmatprep.subr.mxu0 0.0
    %948 = vmatpush1.msra.mxu0 0.0
    %949 = vmatprep.subr.mxu0 0.0
    %950 = vmatpush1.msra.mxu0 0.0
    %951 = vmatprep.subr.mxu0 0.0
    %952 = vmatpush1.msra.mxu0 0.0
    %953 = vmatprep.mubr.f32.mxu0 0.0
    %954 = vmatmul.mubr.f32.gmra.mrb[0].mxu0 %v884
    %v955 = vpop.f32.mrb[0].mxu0
    %v956 = vadd.f32 %v882, %v955
    %v957 = vpop.f32.mrb[0].mxu0
    %958 = vmatprep.mubr.f32.mxu0 0.0
    %959 = vmatmul.mubr.f32.gmra.mrb[0].mxu0 %v887
    %v960 = vpop.f32.mrb[0].mxu0
    %v961 = vadd.f32 %v882, %v960
    %v962 = vpop.f32.mrb[0].mxu0
    %963 = vdwg.mxu0
    %v964 = vmul.f32 %v956, 0.5
    %v965 = vmul.f32 %v961, 0.5
    %v966 = vmul.f32 %v956, 0.70710677
    %v967 = vmul.f32 %v961, 0.70710677
    %v968 = verf.f32.pop %v966
    %v969 = verf.f32.pop %v967
    %v970 = vadd.f32 %v968, 1.0
    %v971 = vadd.f32 %v969, 1.0
    %v972 = vmul.f32 %v964, %v970
    %v973 = vmul.f32 %v965, %v971
    %v974 = vld [vmem:[%s8] sm:$0xff]
    %v975 = vld [vmem:[%s8 + $0x8] sm:$0xff]
    %v976 = vld [vmem:[%s8 + $0x10] sm:$0xff]
    %v977 = vld [vmem:[%s8 + $0x18] sm:$0xff]
    %v978 = vld [vmem:[%s8 + $0x20] sm:$0xff]
    %v979 = vld [vmem:[%s8 + $0x28] sm:$0xff]
    %v980 = vld [vmem:[%s8 + $0x30] sm:$0xff]
    %v981 = vld [vmem:[%s8 + $0x38] sm:$0xff]
    %v982 = vlaneseq
    %v983 = vshrl.u32 %v982, 7
    %v984 = vsub.s32 5, %v983
    %v985 = vrot.slane %v38, %v984
    %v987 = vsel %vm663, %v972, 0
    %v990 = vsel %vm663, %v973, 0
    %992 = vmatprep.subr.mxu0 0.0
    %993 = vmatpush1.msra.mxu0 %v974
    %994 = vmatprep.subr.mxu0 0.0
    %995 = vmatpush1.msra.mxu0 %v975
    %996 = vmatprep.subr.mxu0 0.0
    %997 = vmatpush1.msra.mxu0 %v976
    %998 = vmatprep.subr.mxu0 0.0
    %999 = vmatpush1.msra.mxu0 %v977
    %1000 = vmatprep.subr.mxu0 0.0
    %1001 = vmatpush1.msra.mxu0 %v978
    %1002 = vmatprep.subr.mxu0 0.0
    %1003 = vmatpush1.msra.mxu0 %v979
    %1004 = vmatprep.subr.mxu0 0.0
    %1005 = vmatpush1.msra.mxu0 %v980
    %1006 = vmatprep.subr.mxu0 0.0
    %1007 = vmatpush1.msra.mxu0 %v981
    %1008 = vmatprep.subr.mxu0 0.0
    %1009 = vmatpush1.msra.mxu0 0.0
    %1010 = vmatprep.subr.mxu0 0.0
    %1011 = vmatpush1.msra.mxu0 0.0
    %1012 = vmatprep.subr.mxu0 0.0
    %1013 = vmatpush1.msra.mxu0 0.0
    %1014 = vmatprep.subr.mxu0 0.0
    %1015 = vmatpush1.msra.mxu0 0.0
    %1016 = vmatprep.subr.mxu0 0.0
    %1017 = vmatpush1.msra.mxu0 0.0
    %1018 = vmatprep.subr.mxu0 0.0
    %1019 = vmatpush1.msra.mxu0 0.0
    %1020 = vmatprep.subr.mxu0 0.0
    %1021 = vmatpush1.msra.mxu0 0.0
    %1022 = vmatprep.subr.mxu0 0.0
    %1023 = vmatpush1.msra.mxu0 0.0
    %1024 = vmatprep.subr.mxu0 0.0
    %1025 = vmatpush1.msra.mxu0 0.0
    %1026 = vmatprep.subr.mxu0 0.0
    %1027 = vmatpush1.msra.mxu0 0.0
    %1028 = vmatprep.subr.mxu0 0.0
    %1029 = vmatpush1.msra.mxu0 0.0
    %1030 = vmatprep.subr.mxu0 0.0
    %1031 = vmatpush1.msra.mxu0 0.0
    %1032 = vmatprep.subr.mxu0 0.0
    %1033 = vmatpush1.msra.mxu0 0.0
    %1034 = vmatprep.subr.mxu0 0.0
    %1035 = vmatpush1.msra.mxu0 0.0
    %1036 = vmatprep.subr.mxu0 0.0
    %1037 = vmatpush1.msra.mxu0 0.0
    %1038 = vmatprep.subr.mxu0 0.0
    %1039 = vmatpush1.msra.mxu0 0.0
    %1040 = vmatprep.subr.mxu0 0.0
    %1041 = vmatpush1.msra.mxu0 0.0
    %1042 = vmatprep.subr.mxu0 0.0
    %1043 = vmatpush1.msra.mxu0 0.0
    %1044 = vmatprep.subr.mxu0 0.0
    %1045 = vmatpush1.msra.mxu0 0.0
    %1046 = vmatprep.subr.mxu0 0.0
    %1047 = vmatpush1.msra.mxu0 0.0
    %1048 = vmatprep.subr.mxu0 0.0
    %1049 = vmatpush1.msra.mxu0 0.0
    %1050 = vmatprep.subr.mxu0 0.0
    %1051 = vmatpush1.msra.mxu0 0.0
    %1052 = vmatprep.subr.mxu0 0.0
    %1053 = vmatpush1.msra.mxu0 0.0
    %1054 = vmatprep.subr.mxu0 0.0
    %1055 = vmatpush1.msra.mxu0 0.0
    %1056 = vmatprep.mubr.f32.mxu0 0.0
    %1057 = vmatmul.mubr.f32.gmra.mrb[0].mxu0 %v987
    %v1058 = vpop.f32.mrb[0].mxu0
    %v1059 = vadd.f32 %v985, %v1058
    %v1060 = vpop.f32.mrb[0].mxu0
    %1061 = vmatprep.mubr.f32.mxu0 0.0
    %1062 = vmatmul.mubr.f32.gmra.mrb[0].mxu0 %v990
    %v1063 = vpop.f32.mrb[0].mxu0
    %v1064 = vadd.f32 %v985, %v1063
    %v1065 = vpop.f32.mrb[0].mxu0
    %1066 = vdwg.mxu0
    %v1067 = vadd.f32 %v1059, %v873
    %v1068 = vadd.f32 %v1064, %v874
    %v1069 = vsel %vm47, %v1067, 0.0
    %1070 = vadd.xlane.f32.xlu0 %v1069
    %v1071 = vpop.xlane.xlu0 %1070
    %v1072 = vsel %vm47, %v1068, 0.0
    %1073 = vadd.xlane.f32.xlu0 %v1072
    %v1074 = vpop.xlane.xlu0 %1073
    %v1075 = vmul.f32 %v1071, %v842
    %v1076 = vmul.f32 %v1074, %v842
    %v1077 = vsub.f32 %v1067, %v1075
    %v1078 = vsub.f32 %v1068, %v1076
    %v1079 = vmul.f32 %v1077, %v1077
    %v1080 = vmul.f32 %v1078, %v1078
    %v1081 = vsel %vm47, %v1079, 0.0
    %1082 = vadd.xlane.f32.xlu0 %v1081
    %v1083 = vpop.xlane.xlu0 %1082
    %v1084 = vsel %vm47, %v1080, 0.0
    %1085 = vadd.xlane.f32.xlu0 %v1084
    %v1086 = vpop.xlane.xlu0 %1085
    %v1087 = vmul.f32 %v1083, %v842
    %v1088 = vmul.f32 %v1086, %v842
    %v1089 = vadd.f32 %v1087, 1e-12
    %v1090 = vadd.f32 %v1088, 1e-12
    %v1091 = vrsqrt.pop %v1089
    %v1092 = vrsqrt.pop %v1090
    %v1093 = vmul.f32 %v1077, %v1091
    %v1094 = vmul.f32 %v1078, %v1092
    %v1095 = vlaneseq
    %v1096 = vshrl.u32 %v1095, 7
    %v1097 = vsub.s32 6, %v1096
    %v1098 = vrot.slane %v38, %v1097
    %v1099 = vmul.f32 %v1093, %v1098
    %v1100 = vmul.f32 %v1094, %v1098
    %v1101 = vlaneseq
    %v1102 = vshrl.u32 %v1101, 7
    %v1103 = vsub.s32 7, %v1102
    %v1104 = vrot.slane %v38, %v1103
    %v1105 = vadd.f32 %v1099, %v1104
    %v1106 = vadd.f32 %v1100, %v1104
    %1107 = vst.msk [vmem:[#allocation2] sm:$0xff] %vm47, %v1105
    %1108 = vst.msk [vmem:[#allocation2 + $0x8] sm:$0xff] %vm47, %v1106
    // Predicated region
    $region42: #{bert_layer.1} parent=1 // pred_check
      _
    $region43: #{bert_layer.1} parent=1 // pred_check_branch
      %1110 = sbr.rel (0) target = $region45
    $region44: #{bert_layer.1} parent=1 // pred_region
      %s1112 = ssub.s32 256, 256
      %1113 = vsyncadd [#allocation3], %s1112
      %s1114 = sshll.u32 [#allocation2], 4
      %s1115 = int_to_ptr.vmem [resolvable:$true] %s1114
      %1120 = dma.vmem_to_hbm [thread:$0]  %s1115, 256, %s10, [#allocation3], 128, 128, 8
    $region45: #{bert_layer.1} parent=1 // pred_fallthru
      _
    // Predicated region
    $region46: #{bert_layer.1} parent=1 // pred_check
      _
    $region47: #{bert_layer.1} parent=1 // pred_check_branch
      %1122 = sbr.rel (0) target = $region49
    $region48: #{bert_layer.1} parent=1 // pred_region
      %1123 = dma.done [#allocation3], 256
    $region49: #{bert_layer.1} parent=1 // pred_fallthru
      _
    %1124 = vsyncpa [#allocation3], 1

</llo_original>
